<compile_context>
chip_gen: v7x
topology: tpu7x:2x2x1
jax: 0.10.0
libtpu: 0.0.40
codegen_flags: <defaults>
</compile_context>

<pallas_src>
import math
import functools

import jax
import jax.numpy as jnp
import numpy as np
from jax import lax
from jax.experimental import pallas as pl
from jax.experimental.pallas import tpu as pltpu

_INV_SQRT2 = 1.0 / math.sqrt(2.0)
_LN_EPS = 1e-5
_NEG_INF = -1e30
_LANES = 128


def _round_up(n, m):
    return ((n + m - 1) // m) * m


def _pick_tile_b(batch):
    """Batch tile: full batch for small B; otherwise the largest multiple-of-8 divisor of B that
    is <= 512 and leaves >= 2 grid steps (keeps both v7x TensorCores busy and amortizes the
    ~0.35 us per-grid-step pipeline overhead with fat tiles)."""
    if batch <= 64:
        return batch
    cap = min(512, batch // 2)
    for t in range(cap - cap % 8, 0, -8):
        if batch % t == 0:
            return t
    return batch  # fallback: single full-batch tile (always a legal block shape)


def actor_critic_kernel(x_ref, w_ref, v_ref, out_ref, *, obs_p, hid, act):
    """x_ref: (TILE_B, obs_p) f32; w_ref: (5, P, P) bf16; v_ref: (16, P) f32; out_ref: (TILE_B, P).

    v_ref rows: 0-3 = biases, 4-7 = gammas, 8-11 = betas, 12 = fused head bias, 13-15 = zero pad.
    w_ref[4] columns: [0, act) actor weights, column `act` = critic weight, rest zero.
    Padded lanes of every hidden activation are exactly zero (zero W columns / bias / gamma /
    beta), so LayerNorm sums over all P lanes divided by the true `hid` are exact and no
    per-layer lane mask is needed.
    """
    P = out_ref.shape[-1]
    lane = lax.broadcasted_iota(jnp.int32, (1, P), 1)
    inv_hid = 1.0 / float(hid)

    def ln_gelu(h, li):
        h = h + v_ref[li:li + 1, :]
        g = v_ref[4 + li:5 + li, :]
        beta = v_ref[8 + li:9 + li, :]
        mu = jnp.sum(h, axis=-1, keepdims=True) * inv_hid
        var = jnp.maximum(jnp.sum(h * h, axis=-1, keepdims=True) * inv_hid - mu * mu, 0.0)
        hn = (h - mu) * lax.rsqrt(var + _LN_EPS) * g + beta
        # exact GELU: 0.5 * x * (1 + erf(x / sqrt(2)))  (nn.GELU default approximate='none')
        return 0.5 * hn * (1.0 + lax.erf(hn * _INV_SQRT2))

    # Layer 0 consumes the (nearly) unpadded input: K = obs_p instead of P.
    x = x_ref[...]
    z = ln_gelu(jnp.dot(x.astype(jnp.bfloat16), w_ref[0, :obs_p, :],
                        preferred_element_type=jnp.float32), 0)
    for li in range(1, 4):
        z = ln_gelu(jnp.dot(z.astype(jnp.bfloat16), w_ref[li],
                            preferred_element_type=jnp.float32), li)
    # TODO(synk): Dropout(p=0.1) is identity here (inference / eval-mode forward only).

    # Fused actor+critic head: one MXU pass, one lane-dense 128-wide output store.
    head = jnp.dot(z.astype(jnp.bfloat16), w_ref[4],
                   preferred_element_type=jnp.float32) + v_ref[12:13, :]
    logits = jnp.where(lane < act, head, _NEG_INF)      # mask padded lanes (+ critic lane)
    m = jnp.max(logits, axis=-1, keepdims=True)
    e = jnp.exp(logits - m)
    probs = e * pl.reciprocal(jnp.sum(e, axis=-1, keepdims=True), approx=True)
    # Lane `act` of `probs` is exactly 0 (masked), so drop the critic value into that lane.
    out_ref[...] = probs + jnp.where(lane == act, head, 0.0)


def pack_params(params, obs, act, hid):
    """Pack the 18 logical parameter tensors into two lane-dense buffers: a bf16 (5, P, P)
    weight stack (MXU operands) and an f32 (16, P) bias/gamma/beta stack -> 3 input DMAs."""
    P = _round_up(max(obs, hid, act + 1), _LANES)
    w_all = np.zeros((5, P, P), np.float32)
    v_all = np.zeros((16, P), np.float32)
    in_f = obs
    for li in range(4):
        w, b, g, be = params[4 * li: 4 * li + 4]
        w_all[li, :in_f, :hid] = np.asarray(w)
        v_all[li, :hid] = np.asarray(b)[0]
        v_all[4 + li, :hid] = np.asarray(g)[0]
        v_all[8 + li, :hid] = np.asarray(be)[0]
        in_f = hid
    wa, ba, wc, bc = params[16:]
    w_all[4, :hid, :act] = np.asarray(wa)
    w_all[4, :hid, act] = np.asarray(wc)[:, 0]
    v_all[12, :act] = np.asarray(ba)[0]
    v_all[12, act] = np.asarray(bc)[0, 0]
    return jnp.asarray(w_all, jnp.bfloat16), jnp.asarray(v_all, jnp.float32), P


def actor_critic_forward(x, params, obs, act, hid):
    """x: (B, obs) float32. params: flat tuple of PyTorch-shaped arrays (Linear W as (in, out))."""
    B = x.shape[0]
    w_all, v_all, P = pack_params(params, obs, act, hid)

    # Stream the input (nearly) unpadded: only round obs up to a sublane multiple of 8.
    obs_p = max(8, _round_up(obs, 8))
    if obs_p != obs:
        x = jnp.pad(x, ((0, 0), (0, obs_p - obs)))

    tile_b = _pick_tile_b(B)
    assert B % tile_b == 0, "batch must be divisible by the chosen batch tile"
    grid = (B // tile_b,)

    kernel = functools.partial(actor_critic_kernel, obs_p=obs_p, hid=hid, act=act)
    out = pl.pallas_call(
        kernel,
        out_shape=jax.ShapeDtypeStruct((B, P), jnp.float32),
        grid=grid,
        in_specs=[
            pl.BlockSpec((tile_b, obs_p), lambda i: (i, 0)),
            # Constant index maps -> the ~160 KiB bf16 weight stack and the bias/LN vector stack
            # stay VMEM-resident across the whole grid.
            # (pipeline_mode=pl.Buffered(1) would also drop their unused second buffer; omitted
            #  for portability, the saving is <200 KiB.)
            pl.BlockSpec((5, P, P), lambda i: (0, 0, 0)),
            pl.BlockSpec((16, P), lambda i: (0, 0)),
        ],
        out_specs=pl.BlockSpec((tile_b, P), lambda i: (i, 0)),
        # No vmem_limit_bytes: real footprint is a few MiB, well under the default scoped limit
        # on every generation (64 MiB would claim all of v7x's physical per-core VMEM).
        compiler_params=pltpu.CompilerParams(
            dimension_semantics=("parallel",),
            # TODO(synk): on v7x, pltpu.CORE_PARALLEL on this axis explicitly shards the >=2
            # grid steps across both TensorCores.
        ),
    )(x, w_all, v_all)

    return out[:, :act], out[:, act]


def init_params(key, obs, act, hid):
    """Deterministic synthetic params. Linear weights stored as (in, out)."""
    params = []
    in_f = obs
    for _ in range(4):
        key, kw, kb = jax.random.split(key, 3)
        w = 0.05 * jax.random.normal(kw, (in_f, hid), jnp.float32)
        b = 0.01 * jax.random.normal(kb, (1, hid), jnp.float32)
        gamma = jnp.ones((1, hid), jnp.float32)
        beta = jnp.zeros((1, hid), jnp.float32)
        params += [w, b, gamma, beta]
        in_f = hid
    key, kaw, kab, kcw, kcb = jax.random.split(key, 5)
    wa = 0.05 * jax.random.normal(kaw, (hid, act), jnp.float32)
    ba = 0.01 * jax.random.normal(kab, (1, act), jnp.float32)
    wc = 0.05 * jax.random.normal(kcw, (hid, 1), jnp.float32)
    bc = 0.01 * jax.random.normal(kcb, (1, 1), jnp.float32)
    params += [wa, ba, wc, bc]
    return tuple(params)


def reference_forward(x, params):
    """Pure-JAX f32 reference (matches the PyTorch forward semantics)."""
    z = x
    for li in range(4):
        w, b, g, be = params[4 * li: 4 * li + 4]
        h = z @ w + b
        mu = jnp.mean(h, axis=-1, keepdims=True)
        var = jnp.mean((h - mu) ** 2, axis=-1, keepdims=True)
        hn = (h - mu) / jnp.sqrt(var + _LN_EPS) * g + be
        z = 0.5 * hn * (1.0 + lax.erf(hn * _INV_SQRT2))
    wa, ba, wc, bc = params[16:]
    logits = z @ wa + ba
    probs = jax.nn.softmax(logits, axis=-1)
    value = (z @ wc + bc)[:, 0]
    return probs, value


if __name__ == "__main__":
    B, OBS, ACT, HID = 8, 16, 6, 32

    key = jax.random.PRNGKey(0)
    key, kx = jax.random.split(key)
    x = jax.random.normal(kx, (B, OBS), jnp.float32)
    params = init_params(key, OBS, ACT, HID)

    probs, value = actor_critic_forward(x, params, OBS, ACT, HID)
    probs, value = jax.block_until_ready((probs, value))

    probs_ref, value_ref = reference_forward(x, params)
    assert probs.shape == (B, ACT) and value.shape == (B,)
    # Tolerances cover bf16 MXU operands (f32 accumulate), the E[h^2]-mu^2 LayerNorm variance,
    # and the EUP approximate reciprocal in the softmax denominator.
    np.testing.assert_allclose(np.asarray(probs), np.asarray(probs_ref), rtol=5e-2, atol=1e-2)
    np.testing.assert_allclose(np.asarray(value), np.asarray(value_ref), rtol=5e-2, atol=1e-2)

    print("KERNEL_OK")
</pallas_src>

<mosaic_0001>
module attributes {stable_mosaic.version = 11 : i64} {
  func.func @actor_critic_kernel(%arg0: i32, %arg1: memref<8x16xf32, #tpu.memory_space<vmem>>, %arg2: memref<5x128x128xbf16, #tpu.memory_space<vmem>>, %arg3: memref<16x128xf32, #tpu.memory_space<vmem>>, %arg4: memref<8x128xf32, #tpu.memory_space<vmem>>) attributes {dimension_semantics = [#tpu.dimension_semantics<parallel>], iteration_bounds = array<i64: 1>, scalar_prefetch = 0 : i64, scratch_operands = 0 : i64, tpu.core_type = #tpu.core_type<tc>, window_params = [{transform_indices = @transform_0, window_bounds = array<i64: 8, 16>}, {pipeline_mode = #tpu.pipeline_mode<synchronous>, transform_indices = @transform_1, window_bounds = array<i64: 5, 128, 128>}, {pipeline_mode = #tpu.pipeline_mode<synchronous>, transform_indices = @transform_2, window_bounds = array<i64: 16, 128>}, {transform_indices = @transform_3, window_bounds = array<i64: 8, 128>}]} {
    %0 = tpu.iota {dimensions = array<i32: 1>} : vector<1x128xi32>
    %c0 = arith.constant 0 : index
    %c0_0 = arith.constant 0 : index
    %1 = vector.load %arg1[%c0, %c0_0] : memref<8x16xf32, #tpu.memory_space<vmem>>, vector<8x16xf32>
    %2 = arith.truncf %1 : vector<8x16xf32> to vector<8x16xbf16>
    %c0_1 = arith.constant 0 : index
    %c0_2 = arith.constant 0 : index
    %c0_3 = arith.constant 0 : index
    %3 = vector.load %arg2[%c0_1, %c0_2, %c0_3] : memref<5x128x128xbf16, #tpu.memory_space<vmem>>, vector<1x16x128xbf16>
    %4 = vector.shape_cast %3 : vector<1x16x128xbf16> to vector<16x128xbf16>
    %cst = arith.constant dense<0.000000e+00> : vector<8x128xf32>
    %5 = tpu.matmul %2, %4, %cst {dimension_numbers = #tpu.dot_dimension_numbers<[1], [0], [0], [1], [0, 0, 1, 1], [], []>} : vector<8x16xbf16>, vector<16x128xbf16>, vector<8x128xf32> -> vector<8x128xf32>
    %c0_4 = arith.constant 0 : index
    %c0_5 = arith.constant 0 : index
    %6 = vector.load %arg3[%c0_4, %c0_5] : memref<16x128xf32, #tpu.memory_space<vmem>>, vector<1x128xf32>
    %7 = vector.broadcast %6 : vector<1x128xf32> to vector<8x128xf32>
    %8 = arith.addf %5, %7 : vector<8x128xf32>
    %c4 = arith.constant 4 : index
    %c0_6 = arith.constant 0 : index
    %9 = vector.load %arg3[%c4, %c0_6] : memref<16x128xf32, #tpu.memory_space<vmem>>, vector<1x128xf32>
    %c8 = arith.constant 8 : index
    %c0_7 = arith.constant 0 : index
    %10 = vector.load %arg3[%c8, %c0_7] : memref<16x128xf32, #tpu.memory_space<vmem>>, vector<1x128xf32>
    %cst_8 = arith.constant dense<0.000000e+00> : vector<8xf32>
    %11 = vector.multi_reduction <add>, %8, %cst_8 [1] : vector<8x128xf32> to vector<8xf32>
    %12 = vector.shape_cast %11 : vector<8xf32> to vector<8x1xf32>
    %cst_9 = arith.constant 3.125000e-02 : f32
    %13 = vector.broadcast %cst_9 : f32 to vector<8x1xf32>
    %14 = arith.mulf %12, %13 : vector<8x1xf32>
    %15 = arith.mulf %8, %8 : vector<8x128xf32>
    %cst_10 = arith.constant dense<0.000000e+00> : vector<8xf32>
    %16 = vector.multi_reduction <add>, %15, %cst_10 [1] : vector<8x128xf32> to vector<8xf32>
    %17 = vector.shape_cast %16 : vector<8xf32> to vector<8x1xf32>
    %cst_11 = arith.constant 3.125000e-02 : f32
    %18 = vector.broadcast %cst_11 : f32 to vector<8x1xf32>
    %19 = arith.mulf %17, %18 : vector<8x1xf32>
    %20 = arith.mulf %14, %14 : vector<8x1xf32>
    %21 = arith.subf %19, %20 : vector<8x1xf32>
    %cst_12 = arith.constant 0.000000e+00 : f32
    %22 = vector.broadcast %cst_12 : f32 to vector<8x1xf32>
    %23 = arith.maximumf %21, %22 : vector<8x1xf32>
    %24 = vector.broadcast %14 : vector<8x1xf32> to vector<8x128xf32>
    %25 = arith.subf %8, %24 : vector<8x128xf32>
    %cst_13 = arith.constant 9.99999974E-6 : f32
    %26 = vector.broadcast %cst_13 : f32 to vector<8x1xf32>
    %27 = arith.addf %23, %26 : vector<8x1xf32>
    %28 = math.rsqrt %27 : vector<8x1xf32>
    %29 = vector.broadcast %28 : vector<8x1xf32> to vector<8x128xf32>
    %30 = arith.mulf %25, %29 : vector<8x128xf32>
    %31 = vector.broadcast %9 : vector<1x128xf32> to vector<8x128xf32>
    %32 = arith.mulf %30, %31 : vector<8x128xf32>
    %33 = vector.broadcast %10 : vector<1x128xf32> to vector<8x128xf32>
    %34 = arith.addf %32, %33 : vector<8x128xf32>
    %cst_14 = arith.constant 5.000000e-01 : f32
    %35 = vector.broadcast %cst_14 : f32 to vector<8x128xf32>
    %36 = arith.mulf %35, %34 : vector<8x128xf32>
    %cst_15 = arith.constant 0.707106769 : f32
    %37 = vector.broadcast %cst_15 : f32 to vector<8x128xf32>
    %38 = arith.mulf %34, %37 : vector<8x128xf32>
    %39 = math.erf %38 : vector<8x128xf32>
    %cst_16 = arith.constant 1.000000e+00 : f32
    %40 = vector.broadcast %cst_16 : f32 to vector<8x128xf32>
    %41 = arith.addf %40, %39 : vector<8x128xf32>
    %42 = arith.mulf %36, %41 : vector<8x128xf32>
    %43 = arith.truncf %42 : vector<8x128xf32> to vector<8x128xbf16>
    %c1 = arith.constant 1 : index
    %c0_17 = arith.constant 0 : index
    %c0_18 = arith.constant 0 : index
    %44 = vector.load %arg2[%c1, %c0_17, %c0_18] : memref<5x128x128xbf16, #tpu.memory_space<vmem>>, vector<1x128x128xbf16>
    %45 = vector.shape_cast %44 : vector<1x128x128xbf16> to vector<128x128xbf16>
    %cst_19 = arith.constant dense<0.000000e+00> : vector<8x128xf32>
    %46 = tpu.matmul %43, %45, %cst_19 {dimension_numbers = #tpu.dot_dimension_numbers<[1], [0], [0], [1], [0, 0, 1, 1], [], []>} : vector<8x128xbf16>, vector<128x128xbf16>, vector<8x128xf32> -> vector<8x128xf32>
    %c1_20 = arith.constant 1 : index
    %c0_21 = arith.constant 0 : index
    %47 = vector.load %arg3[%c1_20, %c0_21] : memref<16x128xf32, #tpu.memory_space<vmem>>, vector<1x128xf32>
    %48 = vector.broadcast %47 : vector<1x128xf32> to vector<8x128xf32>
    %49 = arith.addf %46, %48 : vector<8x128xf32>
    %c5 = arith.constant 5 : index
    %c0_22 = arith.constant 0 : index
    %50 = vector.load %arg3[%c5, %c0_22] : memref<16x128xf32, #tpu.memory_space<vmem>>, vector<1x128xf32>
    %c9 = arith.constant 9 : index
    %c0_23 = arith.constant 0 : index
    %51 = vector.load %arg3[%c9, %c0_23] : memref<16x128xf32, #tpu.memory_space<vmem>>, vector<1x128xf32>
    %cst_24 = arith.constant dense<0.000000e+00> : vector<8xf32>
    %52 = vector.multi_reduction <add>, %49, %cst_24 [1] : vector<8x128xf32> to vector<8xf32>
    %53 = vector.shape_cast %52 : vector<8xf32> to vector<8x1xf32>
    %cst_25 = arith.constant 3.125000e-02 : f32
    %54 = vector.broadcast %cst_25 : f32 to vector<8x1xf32>
    %55 = arith.mulf %53, %54 : vector<8x1xf32>
    %56 = arith.mulf %49, %49 : vector<8x128xf32>
    %cst_26 = arith.constant dense<0.000000e+00> : vector<8xf32>
    %57 = vector.multi_reduction <add>, %56, %cst_26 [1] : vector<8x128xf32> to vector<8xf32>
    %58 = vector.shape_cast %57 : vector<8xf32> to vector<8x1xf32>
    %cst_27 = arith.constant 3.125000e-02 : f32
    %59 = vector.broadcast %cst_27 : f32 to vector<8x1xf32>
    %60 = arith.mulf %58, %59 : vector<8x1xf32>
    %61 = arith.mulf %55, %55 : vector<8x1xf32>
    %62 = arith.subf %60, %61 : vector<8x1xf32>
    %cst_28 = arith.constant 0.000000e+00 : f32
    %63 = vector.broadcast %cst_28 : f32 to vector<8x1xf32>
    %64 = arith.maximumf %62, %63 : vector<8x1xf32>
    %65 = vector.broadcast %55 : vector<8x1xf32> to vector<8x128xf32>
    %66 = arith.subf %49, %65 : vector<8x128xf32>
    %cst_29 = arith.constant 9.99999974E-6 : f32
    %67 = vector.broadcast %cst_29 : f32 to vector<8x1xf32>
    %68 = arith.addf %64, %67 : vector<8x1xf32>
    %69 = math.rsqrt %68 : vector<8x1xf32>
    %70 = vector.broadcast %69 : vector<8x1xf32> to vector<8x128xf32>
    %71 = arith.mulf %66, %70 : vector<8x128xf32>
    %72 = vector.broadcast %50 : vector<1x128xf32> to vector<8x128xf32>
    %73 = arith.mulf %71, %72 : vector<8x128xf32>
    %74 = vector.broadcast %51 : vector<1x128xf32> to vector<8x128xf32>
    %75 = arith.addf %73, %74 : vector<8x128xf32>
    %cst_30 = arith.constant 5.000000e-01 : f32
    %76 = vector.broadcast %cst_30 : f32 to vector<8x128xf32>
    %77 = arith.mulf %76, %75 : vector<8x128xf32>
    %cst_31 = arith.constant 0.707106769 : f32
    %78 = vector.broadcast %cst_31 : f32 to vector<8x128xf32>
    %79 = arith.mulf %75, %78 : vector<8x128xf32>
    %80 = math.erf %79 : vector<8x128xf32>
    %cst_32 = arith.constant 1.000000e+00 : f32
    %81 = vector.broadcast %cst_32 : f32 to vector<8x128xf32>
    %82 = arith.addf %81, %80 : vector<8x128xf32>
    %83 = arith.mulf %77, %82 : vector<8x128xf32>
    %84 = arith.truncf %83 : vector<8x128xf32> to vector<8x128xbf16>
    %c2 = arith.constant 2 : index
    %c0_33 = arith.constant 0 : index
    %c0_34 = arith.constant 0 : index
    %85 = vector.load %arg2[%c2, %c0_33, %c0_34] : memref<5x128x128xbf16, #tpu.memory_space<vmem>>, vector<1x128x128xbf16>
    %86 = vector.shape_cast %85 : vector<1x128x128xbf16> to vector<128x128xbf16>
    %cst_35 = arith.constant dense<0.000000e+00> : vector<8x128xf32>
    %87 = tpu.matmul %84, %86, %cst_35 {dimension_numbers = #tpu.dot_dimension_numbers<[1], [0], [0], [1], [0, 0, 1, 1], [], []>} : vector<8x128xbf16>, vector<128x128xbf16>, vector<8x128xf32> -> vector<8x128xf32>
    %c2_36 = arith.constant 2 : index
    %c0_37 = arith.constant 0 : index
    %88 = vector.load %arg3[%c2_36, %c0_37] : memref<16x128xf32, #tpu.memory_space<vmem>>, vector<1x128xf32>
    %89 = vector.broadcast %88 : vector<1x128xf32> to vector<8x128xf32>
    %90 = arith.addf %87, %89 : vector<8x128xf32>
    %c6 = arith.constant 6 : index
    %c0_38 = arith.constant 0 : index
    %91 = vector.load %arg3[%c6, %c0_38] : memref<16x128xf32, #tpu.memory_space<vmem>>, vector<1x128xf32>
    %c10 = arith.constant 10 : index
    %c0_39 = arith.constant 0 : index
    %92 = vector.load %arg3[%c10, %c0_39] : memref<16x128xf32, #tpu.memory_space<vmem>>, vector<1x128xf32>
    %cst_40 = arith.constant dense<0.000000e+00> : vector<8xf32>
    %93 = vector.multi_reduction <add>, %90, %cst_40 [1] : vector<8x128xf32> to vector<8xf32>
    %94 = vector.shape_cast %93 : vector<8xf32> to vector<8x1xf32>
    %cst_41 = arith.constant 3.125000e-02 : f32
    %95 = vector.broadcast %cst_41 : f32 to vector<8x1xf32>
    %96 = arith.mulf %94, %95 : vector<8x1xf32>
    %97 = arith.mulf %90, %90 : vector<8x128xf32>
    %cst_42 = arith.constant dense<0.000000e+00> : vector<8xf32>
    %98 = vector.multi_reduction <add>, %97, %cst_42 [1] : vector<8x128xf32> to vector<8xf32>
    %99 = vector.shape_cast %98 : vector<8xf32> to vector<8x1xf32>
    %cst_43 = arith.constant 3.125000e-02 : f32
    %100 = vector.broadcast %cst_43 : f32 to vector<8x1xf32>
    %101 = arith.mulf %99, %100 : vector<8x1xf32>
    %102 = arith.mulf %96, %96 : vector<8x1xf32>
    %103 = arith.subf %101, %102 : vector<8x1xf32>
    %cst_44 = arith.constant 0.000000e+00 : f32
    %104 = vector.broadcast %cst_44 : f32 to vector<8x1xf32>
    %105 = arith.maximumf %103, %104 : vector<8x1xf32>
    %106 = vector.broadcast %96 : vector<8x1xf32> to vector<8x128xf32>
    %107 = arith.subf %90, %106 : vector<8x128xf32>
    %cst_45 = arith.constant 9.99999974E-6 : f32
    %108 = vector.broadcast %cst_45 : f32 to vector<8x1xf32>
    %109 = arith.addf %105, %108 : vector<8x1xf32>
    %110 = math.rsqrt %109 : vector<8x1xf32>
    %111 = vector.broadcast %110 : vector<8x1xf32> to vector<8x128xf32>
    %112 = arith.mulf %107, %111 : vector<8x128xf32>
    %113 = vector.broadcast %91 : vector<1x128xf32> to vector<8x128xf32>
    %114 = arith.mulf %112, %113 : vector<8x128xf32>
    %115 = vector.broadcast %92 : vector<1x128xf32> to vector<8x128xf32>
    %116 = arith.addf %114, %115 : vector<8x128xf32>
    %cst_46 = arith.constant 5.000000e-01 : f32
    %117 = vector.broadcast %cst_46 : f32 to vector<8x128xf32>
    %118 = arith.mulf %117, %116 : vector<8x128xf32>
    %cst_47 = arith.constant 0.707106769 : f32
    %119 = vector.broadcast %cst_47 : f32 to vector<8x128xf32>
    %120 = arith.mulf %116, %119 : vector<8x128xf32>
    %121 = math.erf %120 : vector<8x128xf32>
    %cst_48 = arith.constant 1.000000e+00 : f32
    %122 = vector.broadcast %cst_48 : f32 to vector<8x128xf32>
    %123 = arith.addf %122, %121 : vector<8x128xf32>
    %124 = arith.mulf %118, %123 : vector<8x128xf32>
    %125 = arith.truncf %124 : vector<8x128xf32> to vector<8x128xbf16>
    %c3 = arith.constant 3 : index
    %c0_49 = arith.constant 0 : index
    %c0_50 = arith.constant 0 : index
    %126 = vector.load %arg2[%c3, %c0_49, %c0_50] : memref<5x128x128xbf16, #tpu.memory_space<vmem>>, vector<1x128x128xbf16>
    %127 = vector.shape_cast %126 : vector<1x128x128xbf16> to vector<128x128xbf16>
    %cst_51 = arith.constant dense<0.000000e+00> : vector<8x128xf32>
    %128 = tpu.matmul %125, %127, %cst_51 {dimension_numbers = #tpu.dot_dimension_numbers<[1], [0], [0], [1], [0, 0, 1, 1], [], []>} : vector<8x128xbf16>, vector<128x128xbf16>, vector<8x128xf32> -> vector<8x128xf32>
    %c3_52 = arith.constant 3 : index
    %c0_53 = arith.constant 0 : index
    %129 = vector.load %arg3[%c3_52, %c0_53] : memref<16x128xf32, #tpu.memory_space<vmem>>, vector<1x128xf32>
    %130 = vector.broadcast %129 : vector<1x128xf32> to vector<8x128xf32>
    %131 = arith.addf %128, %130 : vector<8x128xf32>
    %c7 = arith.constant 7 : index
    %c0_54 = arith.constant 0 : index
    %132 = vector.load %arg3[%c7, %c0_54] : memref<16x128xf32, #tpu.memory_space<vmem>>, vector<1x128xf32>
    %c11 = arith.constant 11 : index
    %c0_55 = arith.constant 0 : index
    %133 = vector.load %arg3[%c11, %c0_55] : memref<16x128xf32, #tpu.memory_space<vmem>>, vector<1x128xf32>
    %cst_56 = arith.constant dense<0.000000e+00> : vector<8xf32>
    %134 = vector.multi_reduction <add>, %131, %cst_56 [1] : vector<8x128xf32> to vector<8xf32>
    %135 = vector.shape_cast %134 : vector<8xf32> to vector<8x1xf32>
    %cst_57 = arith.constant 3.125000e-02 : f32
    %136 = vector.broadcast %cst_57 : f32 to vector<8x1xf32>
    %137 = arith.mulf %135, %136 : vector<8x1xf32>
    %138 = arith.mulf %131, %131 : vector<8x128xf32>
    %cst_58 = arith.constant dense<0.000000e+00> : vector<8xf32>
    %139 = vector.multi_reduction <add>, %138, %cst_58 [1] : vector<8x128xf32> to vector<8xf32>
    %140 = vector.shape_cast %139 : vector<8xf32> to vector<8x1xf32>
    %cst_59 = arith.constant 3.125000e-02 : f32
    %141 = vector.broadcast %cst_59 : f32 to vector<8x1xf32>
    %142 = arith.mulf %140, %141 : vector<8x1xf32>
    %143 = arith.mulf %137, %137 : vector<8x1xf32>
    %144 = arith.subf %142, %143 : vector<8x1xf32>
    %cst_60 = arith.constant 0.000000e+00 : f32
    %145 = vector.broadcast %cst_60 : f32 to vector<8x1xf32>
    %146 = arith.maximumf %144, %145 : vector<8x1xf32>
    %147 = vector.broadcast %137 : vector<8x1xf32> to vector<8x128xf32>
    %148 = arith.subf %131, %147 : vector<8x128xf32>
    %cst_61 = arith.constant 9.99999974E-6 : f32
    %149 = vector.broadcast %cst_61 : f32 to vector<8x1xf32>
    %150 = arith.addf %146, %149 : vector<8x1xf32>
    %151 = math.rsqrt %150 : vector<8x1xf32>
    %152 = vector.broadcast %151 : vector<8x1xf32> to vector<8x128xf32>
    %153 = arith.mulf %148, %152 : vector<8x128xf32>
    %154 = vector.broadcast %132 : vector<1x128xf32> to vector<8x128xf32>
    %155 = arith.mulf %153, %154 : vector<8x128xf32>
    %156 = vector.broadcast %133 : vector<1x128xf32> to vector<8x128xf32>
    %157 = arith.addf %155, %156 : vector<8x128xf32>
    %cst_62 = arith.constant 5.000000e-01 : f32
    %158 = vector.broadcast %cst_62 : f32 to vector<8x128xf32>
    %159 = arith.mulf %158, %157 : vector<8x128xf32>
    %cst_63 = arith.constant 0.707106769 : f32
    %160 = vector.broadcast %cst_63 : f32 to vector<8x128xf32>
    %161 = arith.mulf %157, %160 : vector<8x128xf32>
    %162 = math.erf %161 : vector<8x128xf32>
    %cst_64 = arith.constant 1.000000e+00 : f32
    %163 = vector.broadcast %cst_64 : f32 to vector<8x128xf32>
    %164 = arith.addf %163, %162 : vector<8x128xf32>
    %165 = arith.mulf %159, %164 : vector<8x128xf32>
    %166 = arith.truncf %165 : vector<8x128xf32> to vector<8x128xbf16>
    %c4_65 = arith.constant 4 : index
    %c0_66 = arith.constant 0 : index
    %c0_67 = arith.constant 0 : index
    %167 = vector.load %arg2[%c4_65, %c0_66, %c0_67] : memref<5x128x128xbf16, #tpu.memory_space<vmem>>, vector<1x128x128xbf16>
    %168 = vector.shape_cast %167 : vector<1x128x128xbf16> to vector<128x128xbf16>
    %cst_68 = arith.constant dense<0.000000e+00> : vector<8x128xf32>
    %169 = tpu.matmul %166, %168, %cst_68 {dimension_numbers = #tpu.dot_dimension_numbers<[1], [0], [0], [1], [0, 0, 1, 1], [], []>} : vector<8x128xbf16>, vector<128x128xbf16>, vector<8x128xf32> -> vector<8x128xf32>
    %c12 = arith.constant 12 : index
    %c0_69 = arith.constant 0 : index
    %170 = vector.load %arg3[%c12, %c0_69] : memref<16x128xf32, #tpu.memory_space<vmem>>, vector<1x128xf32>
    %171 = vector.broadcast %170 : vector<1x128xf32> to vector<8x128xf32>
    %172 = arith.addf %169, %171 : vector<8x128xf32>
    %c6_i32 = arith.constant 6 : i32
    %173 = vector.broadcast %c6_i32 : i32 to vector<1x128xi32>
    %174 = arith.cmpi slt, %0, %173 : vector<1x128xi32>
    %cst_70 = arith.constant -1.000000e+30 : f32
    %175 = vector.shape_cast %174 : vector<1x128xi1> to vector<1x128xi1>
    %176 = vector.broadcast %175 : vector<1x128xi1> to vector<8x128xi1>
    %177 = vector.broadcast %cst_70 : f32 to vector<8x128xf32>
    %178 = arith.select %176, %172, %177 : vector<8x128xi1>, vector<8x128xf32>
    %cst_71 = arith.constant dense<0xFF800000> : vector<8xf32>
    %179 = vector.multi_reduction <maximumf>, %178, %cst_71 [1] : vector<8x128xf32> to vector<8xf32>
    %180 = vector.shape_cast %179 : vector<8xf32> to vector<8x1xf32>
    %181 = vector.broadcast %180 : vector<8x1xf32> to vector<8x128xf32>
    %182 = arith.subf %178, %181 : vector<8x128xf32>
    %183 = math.exp %182 : vector<8x128xf32>
    %cst_72 = arith.constant dense<0.000000e+00> : vector<8xf32>
    %184 = vector.multi_reduction <add>, %183, %cst_72 [1] : vector<8x128xf32> to vector<8xf32>
    %185 = vector.shape_cast %184 : vector<8xf32> to vector<8x1xf32>
    %186 = tpu.reciprocal %185 {approx = true} : vector<8x1xf32> -> vector<8x1xf32>
    %187 = vector.broadcast %186 : vector<8x1xf32> to vector<8x128xf32>
    %188 = arith.mulf %183, %187 : vector<8x128xf32>
    %c6_i32_73 = arith.constant 6 : i32
    %189 = vector.broadcast %c6_i32_73 : i32 to vector<1x128xi32>
    %190 = arith.cmpi eq, %0, %189 : vector<1x128xi32>
    %cst_74 = arith.constant 0.000000e+00 : f32
    %191 = vector.shape_cast %190 : vector<1x128xi1> to vector<1x128xi1>
    %192 = vector.broadcast %191 : vector<1x128xi1> to vector<8x128xi1>
    %193 = vector.broadcast %cst_74 : f32 to vector<8x128xf32>
    %194 = arith.select %192, %172, %193 : vector<8x128xi1>, vector<8x128xf32>
    %195 = arith.addf %188, %194 : vector<8x128xf32>
    %c0_75 = arith.constant 0 : index
    %c0_76 = arith.constant 0 : index
    %196 = vector.load %arg4[%c0_75, %c0_76] : memref<8x128xf32, #tpu.memory_space<vmem>>, vector<8x128xf32>
    tpu.vector_store %arg4[%c0_75, %c0_76], %195 {strides = array<i32>} : memref<8x128xf32, #tpu.memory_space<vmem>>, vector<8x128xf32>,
    return
  }
  func.func @transform_0(%arg0: i32) -> (i32, i32) {
    %c0_i32 = arith.constant 0 : i32
    %c0_i32_0 = arith.constant 0 : i32
    return %arg0, %c0_i32 : i32, i32
  }
  func.func @transform_1(%arg0: i32) -> (i32, i32, i32) {
    %c0_i32 = arith.constant 0 : i32
    %c0_i32_0 = arith.constant 0 : i32
    %c0_i32_1 = arith.constant 0 : i32
    %c0_i32_2 = arith.constant 0 : i32
    return %c0_i32, %c0_i32_0, %c0_i32_1 : i32, i32, i32
  }
  func.func @transform_2(%arg0: i32) -> (i32, i32) {
    %c0_i32 = arith.constant 0 : i32
    %c0_i32_0 = arith.constant 0 : i32
    %c0_i32_1 = arith.constant 0 : i32
    return %c0_i32, %c0_i32_0 : i32, i32
  }
  func.func @transform_3(%arg0: i32) -> (i32, i32) {
    %c0_i32 = arith.constant 0 : i32
    %c0_i32_0 = arith.constant 0 : i32
    return %arg0, %c0_i32 : i32, i32
  }
}

</mosaic_0001>

<llo_original>
// kernel: tpu_custom_call.1
$region0: #{tpu_custom_call.1}
  #allocation0 [shape = 'u32[]', space=smem, size = 0x4, offset = 0x4, fixed_abs, tag = 'smem constant byte address 0x4 - core index']
  #allocation1 [shape = 'u32[144,128]{1,0:T(1,128)}', space=vmem, size = 0x12000, scoped, tag = 'internal scratch']
  %s0 = inlined_call_operand.hbm [shape: f32[8,16], index: 0, kind: input, shape index: {}]
  %s1 = inlined_call_operand.hbm [shape: bf16[5,128,128], index: 1, kind: input, shape index: {}]
  %s2 = inlined_call_operand.hbm [shape: f32[16,128], index: 2, kind: input, shape index: {}]
  %s3 = inlined_call_operand.hbm [shape: f32[8,128], index: 3, kind: output, shape index: {}]
  %s4 = sld [smem:[#allocation0]]
  $region34: #{tpu_custom_call.1} parent=0
    _
  %s6 = ssub.s32 1, %s4
  %s7 = scalar_select 0, %s6, %s4
  $region1: #{tpu_custom_call.1} parent=0
    #allocation2 [shape = 'u8[4096]{0}', space=vmem, size = 0x1000, scoped, tag = 'input window, operand 0, single buffered']
    #allocation3 [shape = 's32[1]{0}', space=sflag, size = 0x4, scoped, tag = 'scoped memory for tpu_custom_call.1']
    #allocation4 [shape = 's32[1]{0}', space=sflag, size = 0x4, scoped, tag = 'scoped memory for tpu_custom_call.1']
    #allocation5 [shape = 'u8[163840]{0}', space=vmem, size = 0x28000, scoped, tag = 'input window, operand 1, single buffered']
    #allocation6 [shape = 's32[1]{0}', space=sflag, size = 0x4, scoped, tag = 'scoped memory for tpu_custom_call.1']
    #allocation7 [shape = 'u8[8192]{0}', space=vmem, size = 0x2000, scoped, tag = 'input window, operand 2, single buffered']
    #allocation8 [shape = 'u8[4096]{0}', space=vmem, size = 0x1000, scoped, tag = 'output window, operand 0, single buffered']
    %8 = vsyncpa [#allocation3], 0
    %9 = vsyncpa [#allocation6], 0
    %10 = vsyncpa [#allocation4], 0
    // Predicated region
    $region2: #{tpu_custom_call.1} parent=1 // pred_check
      _
    $region3: #{tpu_custom_call.1} parent=1 // pred_check_branch
      %12 = sbr.rel (0) target = $region5
    $region4: #{tpu_custom_call.1} parent=1 // pred_region
      %s14 = ssub.s32 128, 128
      %15 = vsyncadd [#allocation3], %s14
      %s17 = sshll.u32 [#allocation2], 4
      %s18 = int_to_ptr.vmem [resolvable:$true] %s17
      %20 = dma.hbm_to_vmem [thread:$0]  %s0, 128, %s18, [#allocation3]
    $region5: #{tpu_custom_call.1} parent=1 // pred_fallthru
      _
    // Predicated region
    $region6: #{tpu_custom_call.1} parent=1 // pred_check
      _
    $region7: #{tpu_custom_call.1} parent=1 // pred_check_branch
      %22 = sbr.rel (0) target = $region9
    $region8: #{tpu_custom_call.1} parent=1 // pred_region
      %s24 = ssub.s32 5120, 5120
      %25 = vsyncadd [#allocation6], %s24
      %s26 = sshll.u32 [#allocation5], 4
      %s27 = int_to_ptr.vmem [resolvable:$true] %s26
      %32 = dma.hbm_to_vmem [thread:$0]  %s1, 5120, %s27, [#allocation6], 64, 64, 4
    $region9: #{tpu_custom_call.1} parent=1 // pred_fallthru
      _
    // Predicated region
    $region10: #{tpu_custom_call.1} parent=1 // pred_check
      _
    $region11: #{tpu_custom_call.1} parent=1 // pred_check_branch
      %34 = sbr.rel (0) target = $region13
    $region12: #{tpu_custom_call.1} parent=1 // pred_region
      %s36 = ssub.s32 256, 256
      %37 = vsyncadd [#allocation6], %s36
      %s38 = sshll.u32 [#allocation7], 4
      %s39 = int_to_ptr.vmem [resolvable:$true] %s38
      %44 = dma.hbm_to_vmem [thread:$0]  %s2, 256, %s39, [#allocation6], 128, 128, 8
    $region13: #{tpu_custom_call.1} parent=1 // pred_fallthru
      _
    // Predicated region
    $region14: #{tpu_custom_call.1} parent=1 // pred_check
      _
    $region15: #{tpu_custom_call.1} parent=1 // pred_check_branch
      %46 = sbr.rel (0) target = $region17
    $region16: #{tpu_custom_call.1} parent=1 // pred_region
      %47 = dma.done [#allocation3], 128
    $region17: #{tpu_custom_call.1} parent=1 // pred_fallthru
      _
    // Predicated region
    $region18: #{tpu_custom_call.1} parent=1 // pred_check
      _
    $region19: #{tpu_custom_call.1} parent=1 // pred_check_branch
      %49 = sbr.rel (0) target = $region21
    $region20: #{tpu_custom_call.1} parent=1 // pred_region
      %50 = dma.done [#allocation6], 5120
    $region21: #{tpu_custom_call.1} parent=1 // pred_fallthru
      _
    // Predicated region
    $region22: #{tpu_custom_call.1} parent=1 // pred_check
      _
    $region23: #{tpu_custom_call.1} parent=1 // pred_check_branch
      %52 = sbr.rel (0) target = $region25
    $region24: #{tpu_custom_call.1} parent=1 // pred_region
      %53 = dma.done [#allocation6], 256
    $region25: #{tpu_custom_call.1} parent=1 // pred_fallthru
      _
    %v55 = vlaneseq
    %v56 = vand.u32 %v55, 127
    %v57 = vld [vmem:[#allocation2] sm:$0xff]
    %v58 = vpack.c.bf16 %v57, %v57
    %v59 = vld [vmem:[#allocation5] sm:$0xf]
    %v60 = vld [vmem:[#allocation5 + $0x4] sm:$0xf]
    %v61 = vld [vmem:[#allocation7] sm:$0x1]
    %v62 = vlaneseq
    %v63 = vshrl.u32 %v62, 7
    %v64 = vsub.s32 0, %v63
    %v65 = vrot.slane %v61, %v64
    %v68 = vunpack.c.l.b16 %v59
    %v69 = vunpack.c.l.b16 %v60
    %v70 = vpack.c.b16 %v69, %v68
    %vm72 = vcmask 130048
    %v74 = vsel %vm72, %v58, 0
    %76 = vmatprep.subr.bf16.mxu0 0
    %77 = vmatpush1.bf16.msra.mxu0 %v70
    %78 = vmatprep.subr.bf16.mxu0 0
    %79 = vmatpush1.bf16.msra.mxu0 0
    %80 = vmatprep.subr.bf16.mxu0 0
    %81 = vmatpush1.bf16.msra.mxu0 0
    %82 = vmatprep.subr.bf16.mxu0 0
    %83 = vmatpush1.bf16.msra.mxu0 0
    %84 = vmatprep.subr.bf16.mxu0 0
    %85 = vmatpush1.bf16.msra.mxu0 0
    %86 = vmatprep.subr.bf16.mxu0 0
    %87 = vmatpush1.bf16.msra.mxu0 0
    %88 = vmatprep.subr.bf16.mxu0 0
    %89 = vmatpush1.bf16.msra.mxu0 0
    %90 = vmatprep.subr.bf16.mxu0 0
    %91 = vmatpush1.bf16.msra.mxu0 0
    %92 = vmatprep.subr.bf16.mxu0 0
    %93 = vmatpush1.bf16.msra.mxu0 0
    %94 = vmatprep.subr.bf16.mxu0 0
    %95 = vmatpush1.bf16.msra.mxu0 0
    %96 = vmatprep.subr.bf16.mxu0 0
    %97 = vmatpush1.bf16.msra.mxu0 0
    %98 = vmatprep.subr.bf16.mxu0 0
    %99 = vmatpush1.bf16.msra.mxu0 0
    %100 = vmatprep.subr.bf16.mxu0 0
    %101 = vmatpush1.bf16.msra.mxu0 0
    %102 = vmatprep.subr.bf16.mxu0 0
    %103 = vmatpush1.bf16.msra.mxu0 0
    %104 = vmatprep.subr.bf16.mxu0 0
    %105 = vmatpush1.bf16.msra.mxu0 0
    %106 = vmatprep.subr.bf16.mxu0 0
    %107 = vmatpush1.bf16.msra.mxu0 0
    %108 = vmatprep.mubr.bf16.mxu0 0
    %109 = vmatmul.mubr.bf16.gmra.mrb[0].mxu0 %v74
    %v110 = vpop.f32.mrb[0].mxu0
    %v111 = vadd.f32 %v65, %v110
    %v112 = vpop.f32.mrb[0].mxu0
    %v113 = vpop.f32.mrb[0].mxu0
    %v114 = vpop.f32.mrb[0].mxu0
    %115 = vdwg.mxu0
    %v116 = vld [vmem:[#allocation7 + $0x4] sm:$0x1]
    %v117 = vld [vmem:[#allocation7 + $0x8] sm:$0x1]
    %118 = vadd.xlane.f32.xlu0 %v111
    %v119 = vpop.xlane.xlu0 %118
    %v120 = vmul.f32 %v119, 0.03125
    %v121 = vmul.f32 %v111, %v111
    %122 = vadd.xlane.f32.xlu0 %v121
    %v123 = vpop.xlane.xlu0 %122
    %v124 = vmul.f32 %v123, 0.03125
    %v125 = vmul.f32 %v120, %v120
    %v126 = vsub.f32 %v124, %v125
    %v127 = vmax.f32 %v126, 0.0
    %v128 = vsub.f32 %v111, %v120
    %v129 = vadd.f32 %v127, 1e-05
    %v130 = vrsqrt.pop %v129
    %v131 = vmul.f32 %v128, %v130
    %v132 = vlaneseq
    %v133 = vshrl.u32 %v132, 7
    %v134 = vsub.s32 0, %v133
    %v135 = vrot.slane %v116, %v134
    %v136 = vmul.f32 %v131, %v135
    %v137 = vlaneseq
    %v138 = vshrl.u32 %v137, 7
    %v139 = vsub.s32 0, %v138
    %v140 = vrot.slane %v117, %v139
    %v141 = vadd.f32 %v136, %v140
    %v142 = vmul.f32 %v141, 0.5
    %v143 = vmul.f32 %v141, 0.70710677
    %v144 = verf.f32.pop %v143
    %v145 = vadd.f32 %v144, 1.0
    %v146 = vmul.f32 %v142, %v145
    %v147 = vpack.c.bf16 %v146, %v146
    %s148 = scalar_lea.vmem [#allocation5], 64
    %v149 = vld [vmem:[%s148] sm:$0xf]
    %v150 = vld [vmem:[%s148 + $0x4] sm:$0xf]
    %v151 = vld [vmem:[%s148 + $0x8] sm:$0xf]
    %v152 = vld [vmem:[%s148 + $0xc] sm:$0xf]
    %v153 = vld [vmem:[%s148 + $0x10] sm:$0xf]
    %v154 = vld [vmem:[%s148 + $0x14] sm:$0xf]
    %v155 = vld [vmem:[%s148 + $0x18] sm:$0xf]
    %v156 = vld [vmem:[%s148 + $0x1c] sm:$0xf]
    %v157 = vld [vmem:[%s148 + $0x20] sm:$0xf]
    %v158 = vld [vmem:[%s148 + $0x24] sm:$0xf]
    %v159 = vld [vmem:[%s148 + $0x28] sm:$0xf]
    %v160 = vld [vmem:[%s148 + $0x2c] sm:$0xf]
    %v161 = vld [vmem:[%s148 + $0x30] sm:$0xf]
    %v162 = vld [vmem:[%s148 + $0x34] sm:$0xf]
    %v163 = vld [vmem:[%s148 + $0x38] sm:$0xf]
    %v164 = vld [vmem:[%s148 + $0x3c] sm:$0xf]
    %v165 = vld [vmem:[#allocation7 + $0x1] sm:$0x1]
    %v166 = vlaneseq
    %v167 = vshrl.u32 %v166, 7
    %v168 = vsub.s32 0, %v167
    %v169 = vrot.slane %v165, %v168
    %v186 = vunpack.c.l.b16 %v149
    %v187 = vunpack.c.l.b16 %v150
    %v188 = vunpack.c.l.b16 %v151
    %v189 = vunpack.c.l.b16 %v152
    %v190 = vunpack.c.l.b16 %v153
    %v191 = vunpack.c.l.b16 %v154
    %v192 = vunpack.c.l.b16 %v155
    %v193 = vunpack.c.l.b16 %v156
    %v194 = vunpack.c.l.b16 %v157
    %v195 = vunpack.c.l.b16 %v158
    %v196 = vunpack.c.l.b16 %v159
    %v197 = vunpack.c.l.b16 %v160
    %v198 = vunpack.c.l.b16 %v161
    %v199 = vunpack.c.l.b16 %v162
    %v200 = vunpack.c.l.b16 %v163
    %v201 = vunpack.c.l.b16 %v164
    %v202 = vpack.c.b16 %v187, %v186
    %v203 = vpack.c.b16 %v189, %v188
    %v204 = vpack.c.b16 %v191, %v190
    %v205 = vpack.c.b16 %v193, %v192
    %v206 = vpack.c.b16 %v195, %v194
    %v207 = vpack.c.b16 %v197, %v196
    %v208 = vpack.c.b16 %v199, %v198
    %v209 = vpack.c.b16 %v201, %v200
    %218 = vmatprep.subr.bf16.mxu0 0
    %219 = vmatpush1.bf16.msra.mxu0 %v202
    %220 = vmatprep.subr.bf16.mxu0 0
    %221 = vmatpush1.bf16.msra.mxu0 %v203
    %222 = vmatprep.subr.bf16.mxu0 0
    %223 = vmatpush1.bf16.msra.mxu0 %v204
    %224 = vmatprep.subr.bf16.mxu0 0
    %225 = vmatpush1.bf16.msra.mxu0 %v205
    %226 = vmatprep.subr.bf16.mxu0 0
    %227 = vmatpush1.bf16.msra.mxu0 %v206
    %228 = vmatprep.subr.bf16.mxu0 0
    %229 = vmatpush1.bf16.msra.mxu0 %v207
    %230 = vmatprep.subr.bf16.mxu0 0
    %231 = vmatpush1.bf16.msra.mxu0 %v208
    %232 = vmatprep.subr.bf16.mxu0 0
    %233 = vmatpush1.bf16.msra.mxu0 %v209
    %234 = vmatprep.subr.bf16.mxu0 0
    %235 = vmatpush1.bf16.msra.mxu0 0
    %236 = vmatprep.subr.bf16.mxu0 0
    %237 = vmatpush1.bf16.msra.mxu0 0
    %238 = vmatprep.subr.bf16.mxu0 0
    %239 = vmatpush1.bf16.msra.mxu0 0
    %240 = vmatprep.subr.bf16.mxu0 0
    %241 = vmatpush1.bf16.msra.mxu0 0
    %242 = vmatprep.subr.bf16.mxu0 0
    %243 = vmatpush1.bf16.msra.mxu0 0
    %244 = vmatprep.subr.bf16.mxu0 0
    %245 = vmatpush1.bf16.msra.mxu0 0
    %246 = vmatprep.subr.bf16.mxu0 0
    %247 = vmatpush1.bf16.msra.mxu0 0
    %248 = vmatprep.subr.bf16.mxu0 0
    %249 = vmatpush1.bf16.msra.mxu0 0
    %250 = vmatprep.mubr.bf16.mxu0 0
    %251 = vmatmul.mubr.bf16.gmra.mrb[0].mxu0 %v147
    %v252 = vpop.f32.mrb[0].mxu0
    %v253 = vadd.f32 %v169, %v252
    %v254 = vpop.f32.mrb[0].mxu0
    %v255 = vpop.f32.mrb[0].mxu0
    %v256 = vpop.f32.mrb[0].mxu0
    %257 = vdwg.mxu0
    %v258 = vld [vmem:[#allocation7 + $0x5] sm:$0x1]
    %v259 = vld [vmem:[#allocation7 + $0x9] sm:$0x1]
    %260 = vadd.xlane.f32.xlu0 %v253
    %v261 = vpop.xlane.xlu0 %260
    %v262 = vmul.f32 %v261, 0.03125
    %v263 = vmul.f32 %v253, %v253
    %264 = vadd.xlane.f32.xlu0 %v263
    %v265 = vpop.xlane.xlu0 %264
    %v266 = vmul.f32 %v265, 0.03125
    %v267 = vmul.f32 %v262, %v262
    %v268 = vsub.f32 %v266, %v267
    %v269 = vmax.f32 %v268, 0.0
    %v270 = vsub.f32 %v253, %v262
    %v271 = vadd.f32 %v269, 1e-05
    %v272 = vrsqrt.pop %v271
    %v273 = vmul.f32 %v270, %v272
    %v274 = vlaneseq
    %v275 = vshrl.u32 %v274, 7
    %v276 = vsub.s32 0, %v275
    %v277 = vrot.slane %v258, %v276
    %v278 = vmul.f32 %v273, %v277
    %v279 = vlaneseq
    %v280 = vshrl.u32 %v279, 7
    %v281 = vsub.s32 0, %v280
    %v282 = vrot.slane %v259, %v281
    %v283 = vadd.f32 %v278, %v282
    %v284 = vmul.f32 %v283, 0.5
    %v285 = vmul.f32 %v283, 0.70710677
    %v286 = verf.f32.pop %v285
    %v287 = vadd.f32 %v286, 1.0
    %v288 = vmul.f32 %v284, %v287
    %v289 = vpack.c.bf16 %v288, %v288
    %s290 = scalar_lea.vmem [#allocation5], 128
    %v291 = vld [vmem:[%s290] sm:$0xf]
    %v292 = vld [vmem:[%s290 + $0x4] sm:$0xf]
    %v293 = vld [vmem:[%s290 + $0x8] sm:$0xf]
    %v294 = vld [vmem:[%s290 + $0xc] sm:$0xf]
    %v295 = vld [vmem:[%s290 + $0x10] sm:$0xf]
    %v296 = vld [vmem:[%s290 + $0x14] sm:$0xf]
    %v297 = vld [vmem:[%s290 + $0x18] sm:$0xf]
    %v298 = vld [vmem:[%s290 + $0x1c] sm:$0xf]
    %v299 = vld [vmem:[%s290 + $0x20] sm:$0xf]
    %v300 = vld [vmem:[%s290 + $0x24] sm:$0xf]
    %v301 = vld [vmem:[%s290 + $0x28] sm:$0xf]
    %v302 = vld [vmem:[%s290 + $0x2c] sm:$0xf]
    %v303 = vld [vmem:[%s290 + $0x30] sm:$0xf]
    %v304 = vld [vmem:[%s290 + $0x34] sm:$0xf]
    %v305 = vld [vmem:[%s290 + $0x38] sm:$0xf]
    %v306 = vld [vmem:[%s290 + $0x3c] sm:$0xf]
    %v307 = vld [vmem:[#allocation7 + $0x2] sm:$0x1]
    %v308 = vlaneseq
    %v309 = vshrl.u32 %v308, 7
    %v310 = vsub.s32 0, %v309
    %v311 = vrot.slane %v307, %v310
    %v328 = vunpack.c.l.b16 %v291
    %v329 = vunpack.c.l.b16 %v292
    %v330 = vunpack.c.l.b16 %v293
    %v331 = vunpack.c.l.b16 %v294
    %v332 = vunpack.c.l.b16 %v295
    %v333 = vunpack.c.l.b16 %v296
    %v334 = vunpack.c.l.b16 %v297
    %v335 = vunpack.c.l.b16 %v298
    %v336 = vunpack.c.l.b16 %v299
    %v337 = vunpack.c.l.b16 %v300
    %v338 = vunpack.c.l.b16 %v301
    %v339 = vunpack.c.l.b16 %v302
    %v340 = vunpack.c.l.b16 %v303
    %v341 = vunpack.c.l.b16 %v304
    %v342 = vunpack.c.l.b16 %v305
    %v343 = vunpack.c.l.b16 %v306
    %v344 = vpack.c.b16 %v329, %v328
    %v345 = vpack.c.b16 %v331, %v330
    %v346 = vpack.c.b16 %v333, %v332
    %v347 = vpack.c.b16 %v335, %v334
    %v348 = vpack.c.b16 %v337, %v336
    %v349 = vpack.c.b16 %v339, %v338
    %v350 = vpack.c.b16 %v341, %v340
    %v351 = vpack.c.b16 %v343, %v342
    %360 = vmatprep.subr.bf16.mxu0 0
    %361 = vmatpush1.bf16.msra.mxu0 %v344
    %362 = vmatprep.subr.bf16.mxu0 0
    %363 = vmatpush1.bf16.msra.mxu0 %v345
    %364 = vmatprep.subr.bf16.mxu0 0
    %365 = vmatpush1.bf16.msra.mxu0 %v346
    %366 = vmatprep.subr.bf16.mxu0 0
    %367 = vmatpush1.bf16.msra.mxu0 %v347
    %368 = vmatprep.subr.bf16.mxu0 0
    %369 = vmatpush1.bf16.msra.mxu0 %v348
    %370 = vmatprep.subr.bf16.mxu0 0
    %371 = vmatpush1.bf16.msra.mxu0 %v349
    %372 = vmatprep.subr.bf16.mxu0 0
    %373 = vmatpush1.bf16.msra.mxu0 %v350
    %374 = vmatprep.subr.bf16.mxu0 0
    %375 = vmatpush1.bf16.msra.mxu0 %v351
    %376 = vmatprep.subr.bf16.mxu0 0
    %377 = vmatpush1.bf16.msra.mxu0 0
    %378 = vmatprep.subr.bf16.mxu0 0
    %379 = vmatpush1.bf16.msra.mxu0 0
    %380 = vmatprep.subr.bf16.mxu0 0
    %381 = vmatpush1.bf16.msra.mxu0 0
    %382 = vmatprep.subr.bf16.mxu0 0
    %383 = vmatpush1.bf16.msra.mxu0 0
    %384 = vmatprep.subr.bf16.mxu0 0
    %385 = vmatpush1.bf16.msra.mxu0 0
    %386 = vmatprep.subr.bf16.mxu0 0
    %387 = vmatpush1.bf16.msra.mxu0 0
    %388 = vmatprep.subr.bf16.mxu0 0
    %389 = vmatpush1.bf16.msra.mxu0 0
    %390 = vmatprep.subr.bf16.mxu0 0
    %391 = vmatpush1.bf16.msra.mxu0 0
    %392 = vmatprep.mubr.bf16.mxu0 0
    %393 = vmatmul.mubr.bf16.gmra.mrb[0].mxu0 %v289
    %v394 = vpop.f32.mrb[0].mxu0
    %v395 = vadd.f32 %v311, %v394
    %v396 = vpop.f32.mrb[0].mxu0
    %v397 = vpop.f32.mrb[0].mxu0
    %v398 = vpop.f32.mrb[0].mxu0
    %399 = vdwg.mxu0
    %v400 = vld [vmem:[#allocation7 + $0x6] sm:$0x1]
    %v401 = vld [vmem:[#allocation7 + $0xa] sm:$0x1]
    %402 = vadd.xlane.f32.xlu0 %v395
    %v403 = vpop.xlane.xlu0 %402
    %v404 = vmul.f32 %v403, 0.03125
    %v405 = vmul.f32 %v395, %v395
    %406 = vadd.xlane.f32.xlu0 %v405
    %v407 = vpop.xlane.xlu0 %406
    %v408 = vmul.f32 %v407, 0.03125
    %v409 = vmul.f32 %v404, %v404
    %v410 = vsub.f32 %v408, %v409
    %v411 = vmax.f32 %v410, 0.0
    %v412 = vsub.f32 %v395, %v404
    %v413 = vadd.f32 %v411, 1e-05
    %v414 = vrsqrt.pop %v413
    %v415 = vmul.f32 %v412, %v414
    %v416 = vlaneseq
    %v417 = vshrl.u32 %v416, 7
    %v418 = vsub.s32 0, %v417
    %v419 = vrot.slane %v400, %v418
    %v420 = vmul.f32 %v415, %v419
    %v421 = vlaneseq
    %v422 = vshrl.u32 %v421, 7
    %v423 = vsub.s32 0, %v422
    %v424 = vrot.slane %v401, %v423
    %v425 = vadd.f32 %v420, %v424
    %v426 = vmul.f32 %v425, 0.5
    %v427 = vmul.f32 %v425, 0.70710677
    %v428 = verf.f32.pop %v427
    %v429 = vadd.f32 %v428, 1.0
    %v430 = vmul.f32 %v426, %v429
    %v431 = vpack.c.bf16 %v430, %v430
    %s432 = scalar_lea.vmem [#allocation5], 192
    %v433 = vld [vmem:[%s432] sm:$0xf]
    %v434 = vld [vmem:[%s432 + $0x4] sm:$0xf]
    %v435 = vld [vmem:[%s432 + $0x8] sm:$0xf]
    %v436 = vld [vmem:[%s432 + $0xc] sm:$0xf]
    %v437 = vld [vmem:[%s432 + $0x10] sm:$0xf]
    %v438 = vld [vmem:[%s432 + $0x14] sm:$0xf]
    %v439 = vld [vmem:[%s432 + $0x18] sm:$0xf]
    %v440 = vld [vmem:[%s432 + $0x1c] sm:$0xf]
    %v441 = vld [vmem:[%s432 + $0x20] sm:$0xf]
    %v442 = vld [vmem:[%s432 + $0x24] sm:$0xf]
    %v443 = vld [vmem:[%s432 + $0x28] sm:$0xf]
    %v444 = vld [vmem:[%s432 + $0x2c] sm:$0xf]
    %v445 = vld [vmem:[%s432 + $0x30] sm:$0xf]
    %v446 = vld [vmem:[%s432 + $0x34] sm:$0xf]
    %v447 = vld [vmem:[%s432 + $0x38] sm:$0xf]
    %v448 = vld [vmem:[%s432 + $0x3c] sm:$0xf]
    %v449 = vld [vmem:[#allocation7 + $0x3] sm:$0x1]
    %v450 = vlaneseq
    %v451 = vshrl.u32 %v450, 7
    %v452 = vsub.s32 0, %v451
    %v453 = vrot.slane %v449, %v452
    %v470 = vunpack.c.l.b16 %v433
    %v471 = vunpack.c.l.b16 %v434
    %v472 = vunpack.c.l.b16 %v435
    %v473 = vunpack.c.l.b16 %v436
    %v474 = vunpack.c.l.b16 %v437
    %v475 = vunpack.c.l.b16 %v438
    %v476 = vunpack.c.l.b16 %v439
    %v477 = vunpack.c.l.b16 %v440
    %v478 = vunpack.c.l.b16 %v441
    %v479 = vunpack.c.l.b16 %v442
    %v480 = vunpack.c.l.b16 %v443
    %v481 = vunpack.c.l.b16 %v444
    %v482 = vunpack.c.l.b16 %v445
    %v483 = vunpack.c.l.b16 %v446
    %v484 = vunpack.c.l.b16 %v447
    %v485 = vunpack.c.l.b16 %v448
    %v486 = vpack.c.b16 %v471, %v470
    %v487 = vpack.c.b16 %v473, %v472
    %v488 = vpack.c.b16 %v475, %v474
    %v489 = vpack.c.b16 %v477, %v476
    %v490 = vpack.c.b16 %v479, %v478
    %v491 = vpack.c.b16 %v481, %v480
    %v492 = vpack.c.b16 %v483, %v482
    %v493 = vpack.c.b16 %v485, %v484
    %502 = vmatprep.subr.bf16.mxu0 0
    %503 = vmatpush1.bf16.msra.mxu0 %v486
    %504 = vmatprep.subr.bf16.mxu0 0
    %505 = vmatpush1.bf16.msra.mxu0 %v487
    %506 = vmatprep.subr.bf16.mxu0 0
    %507 = vmatpush1.bf16.msra.mxu0 %v488
    %508 = vmatprep.subr.bf16.mxu0 0
    %509 = vmatpush1.bf16.msra.mxu0 %v489
    %510 = vmatprep.subr.bf16.mxu0 0
    %511 = vmatpush1.bf16.msra.mxu0 %v490
    %512 = vmatprep.subr.bf16.mxu0 0
    %513 = vmatpush1.bf16.msra.mxu0 %v491
    %514 = vmatprep.subr.bf16.mxu0 0
    %515 = vmatpush1.bf16.msra.mxu0 %v492
    %516 = vmatprep.subr.bf16.mxu0 0
    %517 = vmatpush1.bf16.msra.mxu0 %v493
    %518 = vmatprep.subr.bf16.mxu0 0
    %519 = vmatpush1.bf16.msra.mxu0 0
    %520 = vmatprep.subr.bf16.mxu0 0
    %521 = vmatpush1.bf16.msra.mxu0 0
    %522 = vmatprep.subr.bf16.mxu0 0
    %523 = vmatpush1.bf16.msra.mxu0 0
    %524 = vmatprep.subr.bf16.mxu0 0
    %525 = vmatpush1.bf16.msra.mxu0 0
    %526 = vmatprep.subr.bf16.mxu0 0
    %527 = vmatpush1.bf16.msra.mxu0 0
    %528 = vmatprep.subr.bf16.mxu0 0
    %529 = vmatpush1.bf16.msra.mxu0 0
    %530 = vmatprep.subr.bf16.mxu0 0
    %531 = vmatpush1.bf16.msra.mxu0 0
    %532 = vmatprep.subr.bf16.mxu0 0
    %533 = vmatpush1.bf16.msra.mxu0 0
    %534 = vmatprep.mubr.bf16.mxu0 0
    %535 = vmatmul.mubr.bf16.gmra.mrb[0].mxu0 %v431
    %v536 = vpop.f32.mrb[0].mxu0
    %v537 = vadd.f32 %v453, %v536
    %v538 = vpop.f32.mrb[0].mxu0
    %v539 = vpop.f32.mrb[0].mxu0
    %v540 = vpop.f32.mrb[0].mxu0
    %541 = vdwg.mxu0
    %v542 = vld [vmem:[#allocation7 + $0x7] sm:$0x1]
    %v543 = vld [vmem:[#allocation7 + $0xb] sm:$0x1]
    %544 = vadd.xlane.f32.xlu0 %v537
    %v545 = vpop.xlane.xlu0 %544
    %v546 = vmul.f32 %v545, 0.03125
    %v547 = vmul.f32 %v537, %v537
    %548 = vadd.xlane.f32.xlu0 %v547
    %v549 = vpop.xlane.xlu0 %548
    %v550 = vmul.f32 %v549, 0.03125
    %v551 = vmul.f32 %v546, %v546
    %v552 = vsub.f32 %v550, %v551
    %v553 = vmax.f32 %v552, 0.0
    %v554 = vsub.f32 %v537, %v546
    %v555 = vadd.f32 %v553, 1e-05
    %v556 = vrsqrt.pop %v555
    %v557 = vmul.f32 %v554, %v556
    %v558 = vlaneseq
    %v559 = vshrl.u32 %v558, 7
    %v560 = vsub.s32 0, %v559
    %v561 = vrot.slane %v542, %v560
    %v562 = vmul.f32 %v557, %v561
    %v563 = vlaneseq
    %v564 = vshrl.u32 %v563, 7
    %v565 = vsub.s32 0, %v564
    %v566 = vrot.slane %v543, %v565
    %v567 = vadd.f32 %v562, %v566
    %v568 = vmul.f32 %v567, 0.5
    %v569 = vmul.f32 %v567, 0.70710677
    %v570 = verf.f32.pop %v569
    %v571 = vadd.f32 %v570, 1.0
    %v572 = vmul.f32 %v568, %v571
    %v573 = vpack.c.bf16 %v572, %v572
    %s574 = scalar_lea.vmem [#allocation5], 256
    %v575 = vld [vmem:[%s574] sm:$0xf]
    %v576 = vld [vmem:[%s574 + $0x4] sm:$0xf]
    %v577 = vld [vmem:[%s574 + $0x8] sm:$0xf]
    %v578 = vld [vmem:[%s574 + $0xc] sm:$0xf]
    %v579 = vld [vmem:[%s574 + $0x10] sm:$0xf]
    %v580 = vld [vmem:[%s574 + $0x14] sm:$0xf]
    %v581 = vld [vmem:[%s574 + $0x18] sm:$0xf]
    %v582 = vld [vmem:[%s574 + $0x1c] sm:$0xf]
    %v583 = vld [vmem:[%s574 + $0x20] sm:$0xf]
    %v584 = vld [vmem:[%s574 + $0x24] sm:$0xf]
    %v585 = vld [vmem:[%s574 + $0x28] sm:$0xf]
    %v586 = vld [vmem:[%s574 + $0x2c] sm:$0xf]
    %v587 = vld [vmem:[%s574 + $0x30] sm:$0xf]
    %v588 = vld [vmem:[%s574 + $0x34] sm:$0xf]
    %v589 = vld [vmem:[%s574 + $0x38] sm:$0xf]
    %v590 = vld [vmem:[%s574 + $0x3c] sm:$0xf]
    %v591 = vld [vmem:[#allocation7 + $0xc] sm:$0x1]
    %v592 = vlaneseq
    %v593 = vshrl.u32 %v592, 7
    %v594 = vsub.s32 0, %v593
    %v595 = vrot.slane %v591, %v594
    %v612 = vunpack.c.l.b16 %v575
    %v613 = vunpack.c.l.b16 %v576
    %v614 = vunpack.c.l.b16 %v577
    %v615 = vunpack.c.l.b16 %v578
    %v616 = vunpack.c.l.b16 %v579
    %v617 = vunpack.c.l.b16 %v580
    %v618 = vunpack.c.l.b16 %v581
    %v619 = vunpack.c.l.b16 %v582
    %v620 = vunpack.c.l.b16 %v583
    %v621 = vunpack.c.l.b16 %v584
    %v622 = vunpack.c.l.b16 %v585
    %v623 = vunpack.c.l.b16 %v586
    %v624 = vunpack.c.l.b16 %v587
    %v625 = vunpack.c.l.b16 %v588
    %v626 = vunpack.c.l.b16 %v589
    %v627 = vunpack.c.l.b16 %v590
    %v628 = vpack.c.b16 %v613, %v612
    %v629 = vpack.c.b16 %v615, %v614
    %v630 = vpack.c.b16 %v617, %v616
    %v631 = vpack.c.b16 %v619, %v618
    %v632 = vpack.c.b16 %v621, %v620
    %v633 = vpack.c.b16 %v623, %v622
    %v634 = vpack.c.b16 %v625, %v624
    %v635 = vpack.c.b16 %v627, %v626
    %644 = vmatprep.subr.bf16.mxu0 0
    %645 = vmatpush1.bf16.msra.mxu0 %v628
    %646 = vmatprep.subr.bf16.mxu0 0
    %647 = vmatpush1.bf16.msra.mxu0 %v629
    %648 = vmatprep.subr.bf16.mxu0 0
    %649 = vmatpush1.bf16.msra.mxu0 %v630
    %650 = vmatprep.subr.bf16.mxu0 0
    %651 = vmatpush1.bf16.msra.mxu0 %v631
    %652 = vmatprep.subr.bf16.mxu0 0
    %653 = vmatpush1.bf16.msra.mxu0 %v632
    %654 = vmatprep.subr.bf16.mxu0 0
    %655 = vmatpush1.bf16.msra.mxu0 %v633
    %656 = vmatprep.subr.bf16.mxu0 0
    %657 = vmatpush1.bf16.msra.mxu0 %v634
    %658 = vmatprep.subr.bf16.mxu0 0
    %659 = vmatpush1.bf16.msra.mxu0 %v635
    %660 = vmatprep.subr.bf16.mxu0 0
    %661 = vmatpush1.bf16.msra.mxu0 0
    %662 = vmatprep.subr.bf16.mxu0 0
    %663 = vmatpush1.bf16.msra.mxu0 0
    %664 = vmatprep.subr.bf16.mxu0 0
    %665 = vmatpush1.bf16.msra.mxu0 0
    %666 = vmatprep.subr.bf16.mxu0 0
    %667 = vmatpush1.bf16.msra.mxu0 0
    %668 = vmatprep.subr.bf16.mxu0 0
    %669 = vmatpush1.bf16.msra.mxu0 0
    %670 = vmatprep.subr.bf16.mxu0 0
    %671 = vmatpush1.bf16.msra.mxu0 0
    %672 = vmatprep.subr.bf16.mxu0 0
    %673 = vmatpush1.bf16.msra.mxu0 0
    %674 = vmatprep.subr.bf16.mxu0 0
    %675 = vmatpush1.bf16.msra.mxu0 0
    %676 = vmatprep.mubr.bf16.mxu0 0
    %677 = vmatmul.mubr.bf16.gmra.mrb[0].mxu0 %v573
    %v678 = vpop.f32.mrb[0].mxu0
    %v679 = vadd.f32 %v595, %v678
    %v680 = vpop.f32.mrb[0].mxu0
    %v681 = vpop.f32.mrb[0].mxu0
    %v682 = vpop.f32.mrb[0].mxu0
    %683 = vdwg.mxu0
    %vm684 = vcmp.lt.s32.totalorder %v56, 6
    %v685 = vsel %vm684, 1, 0
    %vm686 = vcmp.eq.s32.totalorder %v685, 1
    %v687 = vsel %vm686, %v679, -1e+30
    %688 = vmax.xlane.f32.xlu0 %v687
    %v689 = vpop.xlane.xlu0 %688
    %v690 = vsub.f32 %v687, %v689
    %v691 = vmul.f32 %v690, 1.442695
    %v692 = vpow.pop %v691
    %693 = vadd.xlane.f32.xlu0 %v692
    %v694 = vpop.xlane.xlu0 %693
    %v695 = vrcp.pop %v694
    %v696 = vmul.f32 %v692, %v695
    %vm697 = vcmp.eq.s32.totalorder %v56, 6
    %v698 = vsel %vm697, 1, 0
    %vm699 = vcmp.eq.s32.totalorder %v698, 1
    %v700 = vsel %vm699, %v679, 0.0
    %v701 = vadd.f32 %v696, %v700
    %702 = vst [vmem:[#allocation8] sm:$0xff] %v701
    // Predicated region
    $region26: #{tpu_custom_call.1} parent=1 // pred_check
      _
    $region27: #{tpu_custom_call.1} parent=1 // pred_check_branch
      %704 = sbr.rel (0) target = $region29
    $region28: #{tpu_custom_call.1} parent=1 // pred_region
      %s706 = ssub.s32 128, 128
      %707 = vsyncadd [#allocation4], %s706
      %s709 = sshll.u32 [#allocation8], 4
      %s710 = int_to_ptr.vmem [resolvable:$true] %s709
      %712 = dma.vmem_to_hbm [thread:$0]  %s710, 128, %s3, [#allocation4]
    $region29: #{tpu_custom_call.1} parent=1 // pred_fallthru
      _
    // Predicated region
    $region30: #{tpu_custom_call.1} parent=1 // pred_check
      _
    $region31: #{tpu_custom_call.1} parent=1 // pred_check_branch
      %714 = sbr.rel (0) target = $region33
    $region32: #{tpu_custom_call.1} parent=1 // pred_region
      %715 = dma.done [#allocation4], 128
    $region33: #{tpu_custom_call.1} parent=1 // pred_fallthru
      _
    %716 = vsyncpa [#allocation3], 1
    %717 = vsyncpa [#allocation6], 1
    %718 = vsyncpa [#allocation4], 1

</llo_original>
